<compile_context>
chip_gen: v6e
topology: v6e:2x2x1
jax: 0.10.0
libtpu: 0.0.40
codegen_flags: <defaults>
</compile_context>

<pallas_src>
import math

import jax
import jax.numpy as jnp
from jax.experimental import pallas as pl
from jax.experimental.pallas import tpu as pltpu


def _shortcut_kernel(x_ref, sel_ref, pmat_ref, o_ref):
    # x_ref   : (bb*C,    H*W)     flattened input images for this grid step
    # sel_ref : (H*W,     Ho*Wo)   one-hot combined (::2, ::2) spatial selector
    # pmat_ref: (bb*Cout, bb*C)    one-hot channel pad/scatter matrix
    # o_ref   : (bb*Cout, Ho*Wo)   lane-dense, channel-padded, downsampled
    y = jnp.dot(x_ref[...], sel_ref[...],
                preferred_element_type=jnp.float32).astype(x_ref.dtype)
    o = jnp.dot(pmat_ref[...], y, preferred_element_type=jnp.float32)
    o_ref[...] = o.astype(o_ref.dtype)


def _pick_block_batch(n, c, cout, hw, l, itemsize, budget_bytes=12 << 20):
    """Images per grid step.

    Budgets the real per-step footprint (double-buffered input + output
    blocks).  Keeps >= 2 grid steps (for v7x's two TensorCores) only when
    that leaves input blocks >= ~1 MiB; single-TC v5e/v6e lose nothing from
    a single big step.  Block row counts (bb*C, bb*Cout) stay sublane (8)
    aligned unless the block spans the full array.
    """
    per_image = 2 * (c * hw + cout * l) * itemsize
    bb = max(1, budget_bytes // per_image)
    if bb >= n:
        return n                                    # full-dim blocks, always legal
    if (n // 2) * c * hw * itemsize >= (1 << 20):   # both v7x TCs get >=1 MiB blocks
        bb = min(bb, -(-n // 2))
    lcm = lambda a, b: a * b // math.gcd(a, b)
    step = lcm(8 // math.gcd(8, c), 8 // math.gcd(8, cout))
    bb = max(step, (bb // step) * step)
    return min(bb, n)


def lambda_layer(x, *, planes=None, block_batch=None):
    """Pallas implementation of the ResNet option-A shortcut LambdaLayer.

    out = F.pad(x[:, :, ::2, ::2], (0, 0, 0, 0, planes//4, planes//4), 0)
    with the usual CIFAR-ResNet convention planes == 2 * C_in (override via
    `planes=` if the block uses a different plane count).
    """
    N, C, H, W = x.shape
    assert H % 2 == 0 and W % 2 == 0, "stride-2 shortcut expects even H, W"
    Ho, Wo = H // 2, W // 2
    HW, L = H * W, Ho * Wo
    if planes is None:
        planes = 2 * C
    pad = planes // 4
    Cout = C + 2 * pad
    dt = x.dtype

    # Combined spatial one-hot selector: sel[h*W + w, ho*Wo + wo] = 1 iff
    # h == 2*ho and w == 2*wo.  Grid-invariant -> stays VMEM-resident.
    picked = (2 * jnp.arange(Ho)[:, None] * W
              + 2 * jnp.arange(Wo)[None, :]).reshape(-1)            # (L,)
    sel = (jnp.arange(HW)[:, None] == picked[None, :]).astype(dt)   # (HW, L)

    if block_batch is None:
        block_batch = _pick_block_batch(N, C, Cout, HW, L, dt.itemsize)
    bb = block_batch
    grid_n = pl.cdiv(N, bb)
    Np = grid_n * bb

    # Channel pad/scatter one-hot: P[i*Cout + pad + c, i*C + c] = 1.
    # Grid-invariant -> resident; also produces the zero pad rows for free.
    r = jnp.arange(bb * Cout)
    q = jnp.arange(bb * C)
    pmat = ((r[:, None] // Cout == q[None, :] // C)
            & (r[:, None] % Cout == q[None, :] % C + pad)).astype(dt)

    x2 = x.reshape(N * C, HW)                       # free metadata reshape
    if Np != N:                                     # decoupled from divisibility
        x2 = jnp.pad(x2, ((0, (Np - N) * C), (0, 0)))

    out2 = pl.pallas_call(
        _shortcut_kernel,
        out_shape=jax.ShapeDtypeStruct((Np * Cout, L), dt),
        grid_spec=pltpu.PrefetchScalarGridSpec(
            num_scalar_prefetch=0,
            grid=(grid_n,),
            in_specs=[
                pl.BlockSpec((bb * C, HW), lambda b: (b, 0)),
                pl.BlockSpec((HW, L), lambda b: (0, 0)),
                pl.BlockSpec((bb * Cout, bb * C), lambda b: (0, 0)),
            ],
            out_specs=pl.BlockSpec((bb * Cout, L), lambda b: (b, 0)),
        ),
        compiler_params=pltpu.CompilerParams(
            dimension_semantics=("parallel",),
            vmem_limit_bytes=32 << 20,
        ),
    )(x2, sel, pmat)

    # Free metadata reshape back to NCHW (drop batch padding if any).
    return out2[: N * Cout].reshape(N, Cout, Ho, Wo)


if __name__ == "__main__":
    key = jax.random.PRNGKey(0)
    x = jax.random.normal(key, (2, 4, 16, 16), dtype=jnp.float32)

    out = jax.block_until_ready(lambda_layer(x))

    # Reference (pure JAX) of the PyTorch lambda semantics.
    pad = (2 * x.shape[1]) // 4
    ref = jnp.pad(
        x[:, :, ::2, ::2],
        ((0, 0), (pad, pad), (0, 0), (0, 0)),
        mode="constant",
        constant_values=0.0,
    )

    assert out.shape == ref.shape, (out.shape, ref.shape)
    assert jnp.allclose(out, ref, atol=1e-5, rtol=1e-5)
    print("KERNEL_OK")
</pallas_src>

<mosaic_0001>
module attributes {stable_mosaic.version = 11 : i64} {
  func.func @_shortcut_kernel(%arg0: i32, %arg1: memref<8x256xf32, #tpu.memory_space<vmem>>, %arg2: memref<256x64xf32, #tpu.memory_space<vmem>>, %arg3: memref<16x8xf32, #tpu.memory_space<vmem>>, %arg4: memref<16x64xf32, #tpu.memory_space<vmem>>) attributes {dimension_semantics = [#tpu.dimension_semantics<parallel>], iteration_bounds = array<i64: 1>, scalar_prefetch = 0 : i64, scratch_operands = 0 : i64, tpu.core_type = #tpu.core_type<tc>, window_params = [{transform_indices = @transform_0, window_bounds = array<i64: 8, 256>}, {pipeline_mode = #tpu.pipeline_mode<synchronous>, transform_indices = @transform_1, window_bounds = array<i64: 256, 64>}, {pipeline_mode = #tpu.pipeline_mode<synchronous>, transform_indices = @transform_2, window_bounds = array<i64: 16, 8>}, {transform_indices = @transform_3, window_bounds = array<i64: 16, 64>}]} {
    %c0 = arith.constant 0 : index
    %c0_0 = arith.constant 0 : index
    %0 = vector.load %arg1[%c0, %c0_0] : memref<8x256xf32, #tpu.memory_space<vmem>>, vector<8x256xf32>
    %c0_1 = arith.constant 0 : index
    %c0_2 = arith.constant 0 : index
    %1 = vector.load %arg2[%c0_1, %c0_2] : memref<256x64xf32, #tpu.memory_space<vmem>>, vector<256x64xf32>
    %cst = arith.constant dense<0.000000e+00> : vector<8x64xf32>
    %2 = tpu.matmul %0, %1, %cst {dimension_numbers = #tpu.dot_dimension_numbers<[1], [0], [0], [1], [0, 0, 1, 1], [], []>} : vector<8x256xf32>, vector<256x64xf32>, vector<8x64xf32> -> vector<8x64xf32>
    %c0_3 = arith.constant 0 : index
    %c0_4 = arith.constant 0 : index
    %3 = vector.load %arg3[%c0_3, %c0_4] : memref<16x8xf32, #tpu.memory_space<vmem>>, vector<16x8xf32>
    %cst_5 = arith.constant dense<0.000000e+00> : vector<16x64xf32>
    %4 = tpu.matmul %3, %2, %cst_5 {dimension_numbers = #tpu.dot_dimension_numbers<[1], [0], [0], [1], [0, 0, 1, 1], [], []>} : vector<16x8xf32>, vector<8x64xf32>, vector<16x64xf32> -> vector<16x64xf32>
    %c0_6 = arith.constant 0 : index
    %c0_7 = arith.constant 0 : index
    %5 = vector.load %arg4[%c0_6, %c0_7] : memref<16x64xf32, #tpu.memory_space<vmem>>, vector<16x64xf32>
    tpu.vector_store %arg4[%c0_6, %c0_7], %4 {strides = array<i32>} : memref<16x64xf32, #tpu.memory_space<vmem>>, vector<16x64xf32>,
    return
  }
  func.func @transform_0(%arg0: i32) -> (i32, i32) {
    %c0_i32 = arith.constant 0 : i32
    %c0_i32_0 = arith.constant 0 : i32
    return %arg0, %c0_i32 : i32, i32
  }
  func.func @transform_1(%arg0: i32) -> (i32, i32) {
    %c0_i32 = arith.constant 0 : i32
    %c0_i32_0 = arith.constant 0 : i32
    %c0_i32_1 = arith.constant 0 : i32
    return %c0_i32, %c0_i32_0 : i32, i32
  }
  func.func @transform_2(%arg0: i32) -> (i32, i32) {
    %c0_i32 = arith.constant 0 : i32
    %c0_i32_0 = arith.constant 0 : i32
    %c0_i32_1 = arith.constant 0 : i32
    return %c0_i32, %c0_i32_0 : i32, i32
  }
  func.func @transform_3(%arg0: i32) -> (i32, i32) {
    %c0_i32 = arith.constant 0 : i32
    %c0_i32_0 = arith.constant 0 : i32
    return %arg0, %c0_i32 : i32, i32
  }
}

</mosaic_0001>

<llo_original>
// kernel: tpu_custom_call.1
$region0: #{tpu_custom_call.1}
  #allocation0 [shape = 'u32[]', space=smem, size = 0x4, offset = 0x4, fixed_abs, tag = 'smem constant byte address 0x4 - core index']
  #allocation1 [shape = 'u32[144,128]{1,0:T(1,128)}', space=vmem, size = 0x12000, scoped, tag = 'internal scratch']
  %s0 = inlined_call_operand.vmem [shape: f32[8,256], index: 0, kind: input, shape index: {}]
  %s1 = inlined_call_operand.vmem [shape: f32[256,64], index: 1, kind: input, shape index: {}]
  %s2 = inlined_call_operand.vmem [shape: f32[16,8], index: 2, kind: input, shape index: {}]
  %s3 = inlined_call_operand.hbm [shape: f32[16,64], index: 3, kind: output, shape index: {}]
  %s4 = sld [smem:[#allocation0]]
  $region22: #{tpu_custom_call.1} parent=0
    _
  %s6 = ssub.s32 1, %s4
  %s7 = scalar_select 0, %s6, %s4
  $region1: #{tpu_custom_call.1} parent=0
    #allocation2 [shape = 'u8[8192]{0}', space=vmem, size = 0x2000, scoped, tag = 'output window, operand 0, single buffered']
    #allocation3 [shape = 's32[1]{0}', space=sflag, size = 0x4, scoped, tag = 'scoped memory for tpu_custom_call.1']
    %8 = vsyncpa [#allocation3], 0
    // Predicated region
    $region2: #{tpu_custom_call.1} parent=1 // pred_check
      _
    $region3: #{tpu_custom_call.1} parent=1 // pred_check_branch
      %10 = sbr.rel (0) target = $region5
    $region4: #{tpu_custom_call.1} parent=1 // pred_region
      _
    $region5: #{tpu_custom_call.1} parent=1 // pred_fallthru
      _
    // Predicated region
    $region6: #{tpu_custom_call.1} parent=1 // pred_check
      _
    $region7: #{tpu_custom_call.1} parent=1 // pred_check_branch
      %12 = sbr.rel (0) target = $region9
    $region8: #{tpu_custom_call.1} parent=1 // pred_region
      _
    $region9: #{tpu_custom_call.1} parent=1 // pred_fallthru
      _
    // Predicated region
    $region10: #{tpu_custom_call.1} parent=1 // pred_check
      _
    $region11: #{tpu_custom_call.1} parent=1 // pred_check_branch
      %14 = sbr.rel (0) target = $region13
    $region12: #{tpu_custom_call.1} parent=1 // pred_region
      _
    $region13: #{tpu_custom_call.1} parent=1 // pred_fallthru
      _
    %v15 = vld [vmem:[%s0] sm:$0xff]
    %v16 = vld [vmem:[%s0 + $0x8] sm:$0xff]
    %v17 = vld [vmem:[%s1] sm:$0xff]
    %v18 = vld [vmem:[%s1 + $0x8] sm:$0xff]
    %v19 = vld [vmem:[%s1 + $0x10] sm:$0xff]
    %v20 = vld [vmem:[%s1 + $0x18] sm:$0xff]
    %v21 = vld [vmem:[%s1 + $0x20] sm:$0xff]
    %v22 = vld [vmem:[%s1 + $0x28] sm:$0xff]
    %v23 = vld [vmem:[%s1 + $0x30] sm:$0xff]
    %v24 = vld [vmem:[%s1 + $0x38] sm:$0xff]
    %v25 = vld [vmem:[%s1 + $0x40] sm:$0xff]
    %v26 = vld [vmem:[%s1 + $0x48] sm:$0xff]
    %v27 = vld [vmem:[%s1 + $0x50] sm:$0xff]
    %v28 = vld [vmem:[%s1 + $0x58] sm:$0xff]
    %v29 = vld [vmem:[%s1 + $0x60] sm:$0xff]
    %v30 = vld [vmem:[%s1 + $0x68] sm:$0xff]
    %v31 = vld [vmem:[%s1 + $0x70] sm:$0xff]
    %v32 = vld [vmem:[%s1 + $0x78] sm:$0xff]
    %v33 = vld [vmem:[%s1 + $0x80] sm:$0xff]
    %v34 = vld [vmem:[%s1 + $0x88] sm:$0xff]
    %v35 = vld [vmem:[%s1 + $0x90] sm:$0xff]
    %v36 = vld [vmem:[%s1 + $0x98] sm:$0xff]
    %v37 = vld [vmem:[%s1 + $0xa0] sm:$0xff]
    %v38 = vld [vmem:[%s1 + $0xa8] sm:$0xff]
    %v39 = vld [vmem:[%s1 + $0xb0] sm:$0xff]
    %v40 = vld [vmem:[%s1 + $0xb8] sm:$0xff]
    %v41 = vld [vmem:[%s1 + $0xc0] sm:$0xff]
    %v42 = vld [vmem:[%s1 + $0xc8] sm:$0xff]
    %v43 = vld [vmem:[%s1 + $0xd0] sm:$0xff]
    %v44 = vld [vmem:[%s1 + $0xd8] sm:$0xff]
    %v45 = vld [vmem:[%s1 + $0xe0] sm:$0xff]
    %v46 = vld [vmem:[%s1 + $0xe8] sm:$0xff]
    %v47 = vld [vmem:[%s1 + $0xf0] sm:$0xff]
    %v48 = vld [vmem:[%s1 + $0xf8] sm:$0xff]
    %49 = vmatprep.subr.mxu0 0.0
    %50 = vmatpush1.msra.mxu0 %v32
    %51 = vmatprep.subr.mxu0 0.0
    %52 = vmatpush1.msra.mxu0 %v31
    %53 = vmatprep.subr.mxu0 0.0
    %54 = vmatpush1.msra.mxu0 %v30
    %55 = vmatprep.subr.mxu0 0.0
    %56 = vmatpush1.msra.mxu0 %v29
    %57 = vmatprep.subr.mxu0 0.0
    %58 = vmatpush1.msra.mxu0 %v28
    %59 = vmatprep.subr.mxu0 0.0
    %60 = vmatpush1.msra.mxu0 %v27
    %61 = vmatprep.subr.mxu0 0.0
    %62 = vmatpush1.msra.mxu0 %v26
    %63 = vmatprep.subr.mxu0 0.0
    %64 = vmatpush1.msra.mxu0 %v25
    %65 = vmatprep.subr.mxu0 0.0
    %66 = vmatpush1.msra.mxu0 %v24
    %67 = vmatprep.subr.mxu0 0.0
    %68 = vmatpush1.msra.mxu0 %v23
    %69 = vmatprep.subr.mxu0 0.0
    %70 = vmatpush1.msra.mxu0 %v22
    %71 = vmatprep.subr.mxu0 0.0
    %72 = vmatpush1.msra.mxu0 %v21
    %73 = vmatprep.subr.mxu0 0.0
    %74 = vmatpush1.msra.mxu0 %v20
    %75 = vmatprep.subr.mxu0 0.0
    %76 = vmatpush1.msra.mxu0 %v19
    %77 = vmatprep.subr.mxu0 0.0
    %78 = vmatpush1.msra.mxu0 %v18
    %79 = vmatprep.subr.mxu0 0.0
    %80 = vmatpush1.msra.mxu0 %v17
    %81 = vmatprep.subr.mxu0 0.0
    %82 = vmatpush2.msra.mxu0 %v48
    %83 = vmatprep.subr.mxu0 0.0
    %84 = vmatpush2.msra.mxu0 %v47
    %85 = vmatprep.subr.mxu0 0.0
    %86 = vmatpush2.msra.mxu0 %v46
    %87 = vmatprep.subr.mxu0 0.0
    %88 = vmatpush2.msra.mxu0 %v45
    %89 = vmatprep.subr.mxu0 0.0
    %90 = vmatpush2.msra.mxu0 %v44
    %91 = vmatprep.subr.mxu0 0.0
    %92 = vmatpush2.msra.mxu0 %v43
    %93 = vmatprep.subr.mxu0 0.0
    %94 = vmatpush2.msra.mxu0 %v42
    %95 = vmatprep.subr.mxu0 0.0
    %96 = vmatpush2.msra.mxu0 %v41
    %97 = vmatprep.subr.mxu0 0.0
    %98 = vmatpush2.msra.mxu0 %v40
    %99 = vmatprep.subr.mxu0 0.0
    %100 = vmatpush2.msra.mxu0 %v39
    %101 = vmatprep.subr.mxu0 0.0
    %102 = vmatpush2.msra.mxu0 %v38
    %103 = vmatprep.subr.mxu0 0.0
    %104 = vmatpush2.msra.mxu0 %v37
    %105 = vmatprep.subr.mxu0 0.0
    %106 = vmatpush2.msra.mxu0 %v36
    %107 = vmatprep.subr.mxu0 0.0
    %108 = vmatpush2.msra.mxu0 %v35
    %109 = vmatprep.subr.mxu0 0.0
    %110 = vmatpush2.msra.mxu0 %v34
    %111 = vmatprep.subr.mxu0 0.0
    %112 = vmatpush2.msra.mxu0 %v33
    %113 = vmatprep.mubr.f32.mxu0 %v16
    %114 = vmatmul.mubr.f32.gmra.mxu0 %v15
    %v115 = vpop.f32.mrf.mxu0
    %v116 = vadd.f32 0.0, %v115
    %v117 = vpop.f32.mrf.mxu0
    %118 = vdwg.mxu0
    %v119 = vld [vmem:[%s2] sm:$0xff]
    %v120 = vld [vmem:[%s2 + $0x8] sm:$0xff]
    %vm121 = vcmask 64512
    %v123 = vsel %vm121, %v119, 0
    %v126 = vsel %vm121, %v120, 0
    %128 = vmatprep.subr.mxu0 0.0
    %129 = vmatpush1.msra.mxu0 0.0
    %130 = vmatprep.subr.mxu0 0.0
    %131 = vmatpush1.msra.mxu0 0.0
    %132 = vmatprep.subr.mxu0 0.0
    %133 = vmatpush1.msra.mxu0 0.0
    %134 = vmatprep.subr.mxu0 0.0
    %135 = vmatpush1.msra.mxu0 0.0
    %136 = vmatprep.subr.mxu0 0.0
    %137 = vmatpush1.msra.mxu0 0.0
    %138 = vmatprep.subr.mxu0 0.0
    %139 = vmatpush1.msra.mxu0 0.0
    %140 = vmatprep.subr.mxu0 0.0
    %141 = vmatpush1.msra.mxu0 0.0
    %142 = vmatprep.subr.mxu0 0.0
    %143 = vmatpush1.msra.mxu0 0.0
    %144 = vmatprep.subr.mxu0 0.0
    %145 = vmatpush1.msra.mxu0 0.0
    %146 = vmatprep.subr.mxu0 0.0
    %147 = vmatpush1.msra.mxu0 0.0
    %148 = vmatprep.subr.mxu0 0.0
    %149 = vmatpush1.msra.mxu0 0.0
    %150 = vmatprep.subr.mxu0 0.0
    %151 = vmatpush1.msra.mxu0 0.0
    %152 = vmatprep.subr.mxu0 0.0
    %153 = vmatpush1.msra.mxu0 0.0
    %154 = vmatprep.subr.mxu0 0.0
    %155 = vmatpush1.msra.mxu0 0.0
    %156 = vmatprep.subr.mxu0 0.0
    %157 = vmatpush1.msra.mxu0 0.0
    %158 = vmatprep.subr.mxu0 0.0
    %159 = vmatpush1.msra.mxu0 %v116
    %160 = vmatprep.subr.mxu0 0.0
    %161 = vmatpush2.msra.mxu0 0.0
    %162 = vmatprep.subr.mxu0 0.0
    %163 = vmatpush2.msra.mxu0 0.0
    %164 = vmatprep.subr.mxu0 0.0
    %165 = vmatpush2.msra.mxu0 0.0
    %166 = vmatprep.subr.mxu0 0.0
    %167 = vmatpush2.msra.mxu0 0.0
    %168 = vmatprep.subr.mxu0 0.0
    %169 = vmatpush2.msra.mxu0 0.0
    %170 = vmatprep.subr.mxu0 0.0
    %171 = vmatpush2.msra.mxu0 0.0
    %172 = vmatprep.subr.mxu0 0.0
    %173 = vmatpush2.msra.mxu0 0.0
    %174 = vmatprep.subr.mxu0 0.0
    %175 = vmatpush2.msra.mxu0 0.0
    %176 = vmatprep.subr.mxu0 0.0
    %177 = vmatpush2.msra.mxu0 0.0
    %178 = vmatprep.subr.mxu0 0.0
    %179 = vmatpush2.msra.mxu0 0.0
    %180 = vmatprep.subr.mxu0 0.0
    %181 = vmatpush2.msra.mxu0 0.0
    %182 = vmatprep.subr.mxu0 0.0
    %183 = vmatpush2.msra.mxu0 0.0
    %184 = vmatprep.subr.mxu0 0.0
    %185 = vmatpush2.msra.mxu0 0.0
    %186 = vmatprep.subr.mxu0 0.0
    %187 = vmatpush2.msra.mxu0 0.0
    %188 = vmatprep.subr.mxu0 0.0
    %189 = vmatpush2.msra.mxu0 0.0
    %190 = vmatprep.subr.mxu0 0.0
    %191 = vmatpush2.msra.mxu0 0.0
    %192 = vmatprep.mubr.f32.mxu0 0.0
    %193 = vmatmul.mubr.f32.gmra.mxu0 %v123
    %v194 = vpop.f32.mrf.mxu0
    %v195 = vadd.f32 0.0, %v194
    %v196 = vpop.f32.mrf.mxu0
    %197 = vmatprep.mubr.f32.mxu0 0.0
    %198 = vmatmul.mubr.f32.gmra.mxu0 %v126
    %v199 = vpop.f32.mrf.mxu0
    %v200 = vadd.f32 0.0, %v199
    %v201 = vpop.f32.mrf.mxu0
    %202 = vdwg.mxu0
    %vm203 = vcmask 523264
    %204 = vst.msk [vmem:[#allocation2] sm:$0xff] %vm203, %v195
    %205 = vst.msk [vmem:[#allocation2 + $0x8] sm:$0xff] %vm203, %v200
    // Predicated region
    $region14: #{tpu_custom_call.1} parent=1 // pred_check
      _
    $region15: #{tpu_custom_call.1} parent=1 // pred_check_branch
      %207 = sbr.rel (0) target = $region17
    $region16: #{tpu_custom_call.1} parent=1 // pred_region
      %s209 = ssub.s32 256, 256
      %210 = vsyncadd [#allocation3], %s209
      %s211 = sshll.u32 [#allocation2], 4
      %s212 = int_to_ptr.vmem [resolvable:$true] %s211
      %217 = dma.vmem_to_hbm [thread:$0]  %s212, 256, %s3, [#allocation3], 128, 128, 8
    $region17: #{tpu_custom_call.1} parent=1 // pred_fallthru
      _
    // Predicated region
    $region18: #{tpu_custom_call.1} parent=1 // pred_check
      _
    $region19: #{tpu_custom_call.1} parent=1 // pred_check_branch
      %219 = sbr.rel (0) target = $region21
    $region20: #{tpu_custom_call.1} parent=1 // pred_region
      %220 = dma.done [#allocation3], 256
    $region21: #{tpu_custom_call.1} parent=1 // pred_fallthru
      _
    %221 = vsyncpa [#allocation3], 1

</llo_original>
